<compile_context>
chip_gen: v5e
topology: v5e:2x2
jax: 0.10.0
libtpu: 0.0.40
codegen_flags: <defaults>
</compile_context>

<pallas_src>
import functools

import jax
import jax.numpy as jnp
from jax.experimental import pallas as pl
from jax.experimental.pallas import tpu as pltpu

EPS = 1e-5
MXU_DTYPE = jnp.bfloat16   # MXU operand dtype (f32 accumulation). Use jnp.float32 for
                           # bit-closer-to-PyTorch numerics.

# Row-vector slab layout: one (10, E) f32 array instead of 10 tiny DMAs.
R_WCONV, R_BCONV, R_BQ, R_BK, R_BV, R_G1, R_BE1, R_B1, R_W2, R_B2 = range(10)


def transformer_kernel(x_ref, w_ref, rows_ref, mask_ref, out_ref, *, batch, seq):
    B, L = batch, seq
    E = mask_ref.shape[1]
    HL = mask_ref.shape[0]            # num_heads * seq
    H = HL // L
    T = B * L
    mxu = w_ref.dtype                 # bf16 (or f32 if strict numerics requested)

    rows = rows_ref[...]                                   # (10, E) f32 slab
    w_conv, b_conv = rows[R_WCONV:R_WCONV + 1], rows[R_BCONV:R_BCONV + 1]
    b_q, b_k, b_v = rows[R_BQ:R_BQ + 1], rows[R_BK:R_BK + 1], rows[R_BV:R_BV + 1]
    g1, be1 = rows[R_G1:R_G1 + 1], rows[R_BE1:R_BE1 + 1]
    b1 = rows[R_B1:R_B1 + 1]
    w2_eff = rows[R_W2:R_W2 + 1]                           # BN2-gamma-folded fc2 row
    b2_eff = rows[R_B2:R_B2 + 1, 0:1]                      # (1,1): be2@w2 + b2

    w_all = w_ref[...]                                     # (E, 5E) lane-stacked slab
    w_qkv = w_all[:, :3 * E]                               # [wq*scale | wk | wv]
    w_o = w_all[:, 3 * E:4 * E]
    w_1 = w_all[:, 4 * E:]

    x = x_ref[...]                                         # (B*L, 1) token-major

    # ---- Conv1d(1, E, 1) + ReLU; token-major layout == permute(0, 2, 1) ----
    hf = jnp.maximum(x * w_conv + b_conv, 0.0)             # (T, E) f32

    # ---- fused QKV projection: one MXU stream, bf16 operands, f32 accumulation ----
    qkv = jnp.dot(hf.astype(mxu), w_qkv, preferred_element_type=jnp.float32)  # (T, 3E)
    q = qkv[:, :E] + b_q         # Q weights & bias pre-scaled by 1/sqrt(head_dim)
    k = qkv[:, E:2 * E] + b_k
    v = qkv[:, 2 * E:] + b_v

    # Head-expanded K/V: row n = h*L + m holds k[b, m, :] masked to head h's features
    # (tile-aligned sublane concat of L-row blocks: plain copies, no lane relayout).
    mask = mask_ref[...]                                   # (HL, E) 0/1 in mxu dtype
    k_exp = jnp.concatenate([k.astype(mxu).reshape(B, L, E)] * H, axis=1) * mask[None]
    v_exp = jnp.concatenate([v.astype(mxu).reshape(B, L, E)] * H, axis=1) * mask[None]

    # ---- all-heads attention scores in one lane-dense (B, L, H*L) contraction ----
    scores = jnp.einsum('ble,bne->bln', q.astype(mxu).reshape(B, L, E), k_exp,
                        preferred_element_type=jnp.float32)          # (B, L, HL) f32
    # Row-global max is constant within every head's softmax group -> softmax exact.
    # TODO(synk): use a per-head max if score ranges could differ by ~88+ across heads.
    p = jnp.exp(scores - jnp.max(scores, axis=-1, keepdims=True))
    p16 = p.astype(mxu)

    # Unnormalized per-head context; masked v_exp means feature e only picks up rows of
    # its own head, so the PyTorch head-concat is already done (no relayout needed).
    ctx = jnp.einsum('bln,bne->ble', p16, v_exp,
                     preferred_element_type=jnp.float32)             # (B, L, E)

    # Per-head softmax denominators broadcast onto the feature axis via one matmul
    # with the same head mask; floored + EUP approx reciprocal (never NaN on underflow).
    denom = jnp.dot(p16.reshape(T, HL), mask, preferred_element_type=jnp.float32)
    denom = jnp.maximum(denom, 1e-30)
    ctx2 = ctx.reshape(T, E) * pl.reciprocal(denom, approx=True)

    # Output projection. out_proj bias is dropped: it adds the same row vector to every
    # token and cancels exactly in the BN1 mean subtraction below.
    attn = jnp.dot(ctx2.astype(mxu), w_o, preferred_element_type=jnp.float32)  # (T, E)

    # ---- residual + BatchNorm1d(E) over all B*L tokens (training-mode batch stats) ----
    r = attn + hf
    mu1 = jnp.mean(r, axis=0, keepdims=True)
    var1 = jnp.mean(r * r, axis=0, keepdims=True) - mu1 * mu1
    y = (r - mu1) * jax.lax.rsqrt(var1 + EPS) * g1 + be1

    # ---- mean pool over the sequence dimension ----
    pooled = jnp.mean(y.reshape(B, L, E), axis=1)                    # (B, E)

    # ---- fc1 + ReLU + residual ----
    z = jnp.maximum(
        jnp.dot(pooled.astype(mxu), w_1, preferred_element_type=jnp.float32) + b1,
        0.0) + pooled

    # ---- BatchNorm1d over batch; its affine (g2, be2) is folded into fc2 ----
    mu2 = jnp.mean(z, axis=0, keepdims=True)
    var2 = jnp.mean(z * z, axis=0, keepdims=True) - mu2 * mu2
    zn = (z - mu2) * jax.lax.rsqrt(var2 + EPS)

    # ---- fc2 as VPU multiply + XLU lane-reduce (N=1 MXU matmul would be ~1/256 full) ----
    out_ref[...] = (jnp.sum(zn * w2_eff, axis=-1, keepdims=True)
                    + b2_eff).astype(out_ref.dtype)                  # (B, 1)


def init_params(key, embed_dim):
    """PyTorch-equivalent parameter layout (fused in_proj, transposed weights)."""
    E = embed_dim
    ks = jax.random.split(key, 8)

    def rnd(k, shape, s=0.1):
        return jax.random.normal(k, shape, jnp.float32) * s

    return dict(
        w_conv=rnd(ks[0], (1, E)),          # Conv1d weight (E,1,1), stored transposed
        b_conv=rnd(ks[1], (1, E)),
        w_qkv_t=rnd(ks[2], (E, 3 * E)),     # MHA in_proj_weight^T, columns [Q|K|V]
        b_qkv=rnd(ks[3], (1, 3 * E)),
        w_o_t=rnd(ks[4], (E, E)),           # MHA out_proj.weight^T
        b_o=rnd(ks[5], (1, E)),
        g1=jnp.ones((1, E), jnp.float32), be1=jnp.zeros((1, E), jnp.float32),
        g2=jnp.ones((1, E), jnp.float32), be2=jnp.zeros((1, E), jnp.float32),
        w1_t=rnd(ks[6], (E, E)),            # fc1.weight^T
        b1=jnp.zeros((1, E), jnp.float32),
        w2_t=rnd(ks[7], (E, 1)),            # fc2.weight^T
        b2=jnp.zeros((1, 1), jnp.float32),
    )


def prepare_params(params, num_heads, seq_len, mxu_dtype=MXU_DTYPE):
    """One-time wrapper-side packing (outside the kernel):

      * all matmul weights -> ONE lane-stacked (E, 5E) slab
        [wq*scale | wk | wv | wo | w1] in the MXU dtype (single DMA, fused QKV matmul);
      * all (1,E) row vectors -> ONE (10, E) f32 slab (single DMA, sublane row slices);
      * MHA out_proj bias dropped (cancels exactly in BN1 mean subtraction); BN2 affine
        folded into fc2 (w2' = g2*w2, b2' = be2@w2 + b2);
      * (H*L, E) head-feature mask used for score masking + softmax denominators.

    Kernel inputs end up being just: x, weight slab, row slab, head mask (4 DMAs).
    """
    E = params["w_o_t"].shape[0]
    hd = E // num_heads
    scale = 1.0 / float(hd) ** 0.5
    w_qkv_t, b_qkv = params["w_qkv_t"], params["b_qkv"]

    w_big = jnp.concatenate(
        [w_qkv_t[:, :E] * scale, w_qkv_t[:, E:2 * E], w_qkv_t[:, 2 * E:],
         params["w_o_t"], params["w1_t"]], axis=1).astype(mxu_dtype)     # (E, 5E)

    w2_row = params["w2_t"].T                                            # (1, E)
    w2_eff = params["g2"] * w2_row                                       # fold BN2 gamma
    b2_eff = jnp.sum(params["be2"] * w2_row) + params["b2"][0, 0]        # fold BN2 beta

    rows = jnp.concatenate(
        [params["w_conv"], params["b_conv"],
         b_qkv[:, :E] * scale, b_qkv[:, E:2 * E], b_qkv[:, 2 * E:],
         params["g1"], params["be1"], params["b1"],
         w2_eff, jnp.full((1, E), b2_eff, jnp.float32)],
        axis=0).astype(jnp.float32)                                      # (10, E)

    head_of_row = jnp.arange(num_heads * seq_len) // seq_len             # (H*L,)
    head_of_feat = jnp.arange(E) // hd                                   # (E,)
    head_mask = (head_of_row[:, None] == head_of_feat[None, :]).astype(mxu_dtype)

    return dict(w_big=w_big, rows=rows, head_mask=head_mask)


@jax.jit
def transformer_forward(x, kparams):
    # x: (B, 1, L)  -- NCL, like the PyTorch Conv1d input
    B, C, L = x.shape
    assert C == 1
    x_tok = x.reshape(B * L, 1).astype(jnp.float32)       # squeeze channel, token-major

    E = kparams["rows"].shape[1]
    N = kparams["head_mask"].shape[0]                     # H * L
    T = B * L

    kernel = functools.partial(transformer_kernel, batch=B, seq=L)
    vspec = pl.BlockSpec(memory_space=pltpu.MemorySpace.VMEM)
    args = (x_tok, kparams["w_big"], kparams["rows"], kparams["head_mask"])

    flops = (2 * T * E * 3 * E            # fused qkv projection
             + 2 * T * N * E * 3          # scores, context, denominator matmuls
             + 2 * T * E * E              # output projection
             + 2 * B * E * E + 2 * B * E)  # fc1, fc2
    transcendentals = T * N + T * E       # exp + reciprocal
    bytes_accessed = int(sum(a.size * a.dtype.itemsize for a in args) + 4 * B)

    # Single VMEM-resident block, no grid (everything fits trivially on v5e/v6e/v7x).
    return pl.pallas_call(
        kernel,
        out_shape=jax.ShapeDtypeStruct((B, 1), jnp.float32),
        in_specs=[vspec] * len(args),
        out_specs=vspec,
        cost_estimate=pl.CostEstimate(flops=flops,
                                      transcendentals=transcendentals,
                                      bytes_accessed=bytes_accessed),
    )(*args)


if __name__ == "__main__":
    key = jax.random.PRNGKey(0)
    kx, kp = jax.random.split(key)
    B, L, E, H = 2, 16, 32, 8                 # embed_dim=32 -> head_dim=4 (8 heads)
    x = jax.random.normal(kx, (B, 1, L), jnp.float32)

    params = init_params(kp, E)
    kparams = prepare_params(params, num_heads=H, seq_len=L)

    out = transformer_forward(x, kparams)
    jax.block_until_ready(out)
    assert out.shape == (B, 1) and out.dtype == jnp.float32
    print("KERNEL_OK")
</pallas_src>

<mosaic_0001>
module attributes {stable_mosaic.version = 11 : i64} {
  func.func @transformer_kernel(%arg0: memref<32x1xf32, #tpu.memory_space<vmem>>, %arg1: memref<32x160xbf16, #tpu.memory_space<vmem>>, %arg2: memref<10x32xf32, #tpu.memory_space<vmem>>, %arg3: memref<128x32xbf16, #tpu.memory_space<vmem>>, %arg4: memref<2x1xf32, #tpu.memory_space<vmem>>) attributes {dimension_semantics = [], scalar_prefetch = 0 : i64, scratch_operands = 0 : i64, tpu.core_type = #tpu.core_type<tc>} {
    %c0 = arith.constant 0 : index
    %c0_0 = arith.constant 0 : index
    %0 = vector.load %arg2[%c0, %c0_0] : memref<10x32xf32, #tpu.memory_space<vmem>>, vector<10x32xf32>
    %1 = vector.extract_strided_slice %0 {offsets = [0, 0], sizes = [1, 32], strides = [1, 1]} : vector<10x32xf32> to vector<1x32xf32>
    %2 = vector.extract_strided_slice %0 {offsets = [1, 0], sizes = [1, 32], strides = [1, 1]} : vector<10x32xf32> to vector<1x32xf32>
    %3 = vector.extract_strided_slice %0 {offsets = [2, 0], sizes = [1, 32], strides = [1, 1]} : vector<10x32xf32> to vector<1x32xf32>
    %4 = vector.extract_strided_slice %0 {offsets = [3, 0], sizes = [1, 32], strides = [1, 1]} : vector<10x32xf32> to vector<1x32xf32>
    %5 = vector.extract_strided_slice %0 {offsets = [4, 0], sizes = [1, 32], strides = [1, 1]} : vector<10x32xf32> to vector<1x32xf32>
    %6 = vector.extract_strided_slice %0 {offsets = [5, 0], sizes = [1, 32], strides = [1, 1]} : vector<10x32xf32> to vector<1x32xf32>
    %7 = vector.extract_strided_slice %0 {offsets = [6, 0], sizes = [1, 32], strides = [1, 1]} : vector<10x32xf32> to vector<1x32xf32>
    %8 = vector.extract_strided_slice %0 {offsets = [7, 0], sizes = [1, 32], strides = [1, 1]} : vector<10x32xf32> to vector<1x32xf32>
    %9 = vector.extract_strided_slice %0 {offsets = [8, 0], sizes = [1, 32], strides = [1, 1]} : vector<10x32xf32> to vector<1x32xf32>
    %10 = vector.extract_strided_slice %0 {offsets = [9, 0], sizes = [1, 1], strides = [1, 1]} : vector<10x32xf32> to vector<1x1xf32>
    %c0_1 = arith.constant 0 : index
    %c0_2 = arith.constant 0 : index
    %11 = vector.load %arg1[%c0_1, %c0_2] : memref<32x160xbf16, #tpu.memory_space<vmem>>, vector<32x160xbf16>
    %12 = vector.extract_strided_slice %11 {offsets = [0, 0], sizes = [32, 96], strides = [1, 1]} : vector<32x160xbf16> to vector<32x96xbf16>
    %13 = vector.extract_strided_slice %11 {offsets = [0, 96], sizes = [32, 32], strides = [1, 1]} : vector<32x160xbf16> to vector<32x32xbf16>
    %14 = vector.extract_strided_slice %11 {offsets = [0, 128], sizes = [32, 32], strides = [1, 1]} : vector<32x160xbf16> to vector<32x32xbf16>
    %c0_3 = arith.constant 0 : index
    %c0_4 = arith.constant 0 : index
    %15 = vector.load %arg0[%c0_3, %c0_4] : memref<32x1xf32, #tpu.memory_space<vmem>>, vector<32x1xf32>
    %16 = vector.broadcast %15 : vector<32x1xf32> to vector<32x32xf32>
    %17 = vector.broadcast %1 : vector<1x32xf32> to vector<32x32xf32>
    %18 = arith.mulf %16, %17 : vector<32x32xf32>
    %19 = vector.broadcast %2 : vector<1x32xf32> to vector<32x32xf32>
    %20 = arith.addf %18, %19 : vector<32x32xf32>
    %cst = arith.constant 0.000000e+00 : f32
    %21 = vector.broadcast %cst : f32 to vector<32x32xf32>
    %22 = arith.maximumf %20, %21 : vector<32x32xf32>
    %23 = arith.truncf %22 : vector<32x32xf32> to vector<32x32xbf16>
    %cst_5 = arith.constant dense<0.000000e+00> : vector<32x96xf32>
    %24 = tpu.matmul %23, %12, %cst_5 {dimension_numbers = #tpu.dot_dimension_numbers<[1], [0], [0], [1], [0, 0, 1, 1], [], []>} : vector<32x32xbf16>, vector<32x96xbf16>, vector<32x96xf32> -> vector<32x96xf32>
    %25 = vector.extract_strided_slice %24 {offsets = [0, 0], sizes = [32, 32], strides = [1, 1]} : vector<32x96xf32> to vector<32x32xf32>
    %26 = vector.broadcast %3 : vector<1x32xf32> to vector<32x32xf32>
    %27 = arith.addf %25, %26 : vector<32x32xf32>
    %28 = vector.extract_strided_slice %24 {offsets = [0, 32], sizes = [32, 32], strides = [1, 1]} : vector<32x96xf32> to vector<32x32xf32>
    %29 = vector.broadcast %4 : vector<1x32xf32> to vector<32x32xf32>
    %30 = arith.addf %28, %29 : vector<32x32xf32>
    %31 = vector.extract_strided_slice %24 {offsets = [0, 64], sizes = [32, 32], strides = [1, 1]} : vector<32x96xf32> to vector<32x32xf32>
    %32 = vector.broadcast %5 : vector<1x32xf32> to vector<32x32xf32>
    %33 = arith.addf %31, %32 : vector<32x32xf32>
    %c0_6 = arith.constant 0 : index
    %c0_7 = arith.constant 0 : index
    %34 = vector.load %arg3[%c0_6, %c0_7] : memref<128x32xbf16, #tpu.memory_space<vmem>>, vector<128x32xbf16>
    %35 = arith.truncf %30 : vector<32x32xf32> to vector<32x32xbf16>
    %36 = vector.shape_cast %35 : vector<32x32xbf16> to vector<2x16x32xbf16>
    %37 = tpu.concatenate %36, %36, %36, %36, %36, %36, %36, %36 in 1 : vector<2x16x32xbf16>, vector<2x16x32xbf16>, vector<2x16x32xbf16>, vector<2x16x32xbf16>, vector<2x16x32xbf16>, vector<2x16x32xbf16>, vector<2x16x32xbf16>, vector<2x16x32xbf16> -> vector<2x128x32xbf16>
    %38 = vector.shape_cast %34 : vector<128x32xbf16> to vector<1x128x32xbf16>
    %39 = vector.broadcast %38 : vector<1x128x32xbf16> to vector<2x128x32xbf16>
    %40 = arith.mulf %37, %39 : vector<2x128x32xbf16>
    %41 = arith.truncf %33 : vector<32x32xf32> to vector<32x32xbf16>
    %42 = vector.shape_cast %41 : vector<32x32xbf16> to vector<2x16x32xbf16>
    %43 = tpu.concatenate %42, %42, %42, %42, %42, %42, %42, %42 in 1 : vector<2x16x32xbf16>, vector<2x16x32xbf16>, vector<2x16x32xbf16>, vector<2x16x32xbf16>, vector<2x16x32xbf16>, vector<2x16x32xbf16>, vector<2x16x32xbf16>, vector<2x16x32xbf16> -> vector<2x128x32xbf16>
    %44 = vector.shape_cast %34 : vector<128x32xbf16> to vector<1x128x32xbf16>
    %45 = vector.broadcast %44 : vector<1x128x32xbf16> to vector<2x128x32xbf16>
    %46 = arith.mulf %43, %45 : vector<2x128x32xbf16>
    %47 = arith.truncf %27 : vector<32x32xf32> to vector<32x32xbf16>
    %48 = vector.shape_cast %47 : vector<32x32xbf16> to vector<2x16x32xbf16>
    "tpu.trace_start"() <{level = 10 : i32, message = "ble,bne->bln"}> : () -> ()
    %cst_8 = arith.constant dense<0.000000e+00> : vector<2x16x128xf32>
    %49 = tpu.matmul %48, %40, %cst_8 {dimension_numbers = #tpu.dot_dimension_numbers<[2], [2], [1], [1], [0, 0, 0, 1, 1, 1], [0], [0]>} : vector<2x16x32xbf16>, vector<2x128x32xbf16>, vector<2x16x128xf32> -> vector<2x16x128xf32>
    "tpu.trace_stop"() : () -> ()
    %cst_9 = arith.constant dense<0xFF800000> : vector<2x16xf32>
    %50 = vector.multi_reduction <maximumf>, %49, %cst_9 [2] : vector<2x16x128xf32> to vector<2x16xf32>
    %51 = vector.shape_cast %50 : vector<2x16xf32> to vector<2x16x1xf32>
    %52 = vector.broadcast %51 : vector<2x16x1xf32> to vector<2x16x128xf32>
    %53 = arith.subf %49, %52 : vector<2x16x128xf32>
    %54 = math.exp %53 : vector<2x16x128xf32>
    %55 = arith.truncf %54 : vector<2x16x128xf32> to vector<2x16x128xbf16>
    "tpu.trace_start"() <{level = 10 : i32, message = "bln,bne->ble"}> : () -> ()
    %cst_10 = arith.constant dense<0.000000e+00> : vector<2x16x32xf32>
    %56 = tpu.matmul %55, %46, %cst_10 {dimension_numbers = #tpu.dot_dimension_numbers<[2], [1], [1], [2], [0, 0, 0, 1, 1, 2], [0], [0]>} : vector<2x16x128xbf16>, vector<2x128x32xbf16>, vector<2x16x32xf32> -> vector<2x16x32xf32>
    "tpu.trace_stop"() : () -> ()
    %57 = vector.shape_cast %55 : vector<2x16x128xbf16> to vector<32x128xbf16>
    %cst_11 = arith.constant dense<0.000000e+00> : vector<32x32xf32>
    %58 = tpu.matmul %57, %34, %cst_11 {dimension_numbers = #tpu.dot_dimension_numbers<[1], [0], [0], [1], [0, 0, 1, 1], [], []>} : vector<32x128xbf16>, vector<128x32xbf16>, vector<32x32xf32> -> vector<32x32xf32>
    %cst_12 = arith.constant 1.000000e-30 : f32
    %59 = vector.broadcast %cst_12 : f32 to vector<32x32xf32>
    %60 = arith.maximumf %58, %59 : vector<32x32xf32>
    %61 = vector.shape_cast %56 : vector<2x16x32xf32> to vector<32x32xf32>
    %62 = tpu.reciprocal %60 {approx = true} : vector<32x32xf32> -> vector<32x32xf32>
    %63 = arith.mulf %61, %62 : vector<32x32xf32>
    %64 = arith.truncf %63 : vector<32x32xf32> to vector<32x32xbf16>
    %cst_13 = arith.constant dense<0.000000e+00> : vector<32x32xf32>
    %65 = tpu.matmul %64, %13, %cst_13 {dimension_numbers = #tpu.dot_dimension_numbers<[1], [0], [0], [1], [0, 0, 1, 1], [], []>} : vector<32x32xbf16>, vector<32x32xbf16>, vector<32x32xf32> -> vector<32x32xf32>
    %66 = arith.addf %65, %22 : vector<32x32xf32>
    %cst_14 = arith.constant dense<0.000000e+00> : vector<32xf32>
    %67 = vector.multi_reduction <add>, %66, %cst_14 [0] : vector<32x32xf32> to vector<32xf32>
    %68 = vector.shape_cast %67 : vector<32xf32> to vector<1x32xf32>
    %cst_15 = arith.constant 3.200000e+01 : f32
    %69 = vector.broadcast %cst_15 : f32 to vector<1x32xf32>
    %70 = arith.divf %68, %69 : vector<1x32xf32>
    %71 = arith.mulf %66, %66 : vector<32x32xf32>
    %cst_16 = arith.constant dense<0.000000e+00> : vector<32xf32>
    %72 = vector.multi_reduction <add>, %71, %cst_16 [0] : vector<32x32xf32> to vector<32xf32>
    %73 = vector.shape_cast %72 : vector<32xf32> to vector<1x32xf32>
    %cst_17 = arith.constant 3.200000e+01 : f32
    %74 = vector.broadcast %cst_17 : f32 to vector<1x32xf32>
    %75 = arith.divf %73, %74 : vector<1x32xf32>
    %76 = arith.mulf %70, %70 : vector<1x32xf32>
    %77 = arith.subf %75, %76 : vector<1x32xf32>
    %78 = vector.broadcast %70 : vector<1x32xf32> to vector<32x32xf32>
    %79 = arith.subf %66, %78 : vector<32x32xf32>
    %cst_18 = arith.constant 9.99999974E-6 : f32
    %80 = vector.broadcast %cst_18 : f32 to vector<1x32xf32>
    %81 = arith.addf %77, %80 : vector<1x32xf32>
    %82 = math.rsqrt %81 : vector<1x32xf32>
    %83 = vector.broadcast %82 : vector<1x32xf32> to vector<32x32xf32>
    %84 = arith.mulf %79, %83 : vector<32x32xf32>
    %85 = vector.broadcast %6 : vector<1x32xf32> to vector<32x32xf32>
    %86 = arith.mulf %84, %85 : vector<32x32xf32>
    %87 = vector.broadcast %7 : vector<1x32xf32> to vector<32x32xf32>
    %88 = arith.addf %86, %87 : vector<32x32xf32>
    %89 = vector.shape_cast %88 : vector<32x32xf32> to vector<2x16x32xf32>
    %cst_19 = arith.constant dense<0.000000e+00> : vector<2x32xf32>
    %90 = vector.multi_reduction <add>, %89, %cst_19 [1] : vector<2x16x32xf32> to vector<2x32xf32>
    %cst_20 = arith.constant 1.600000e+01 : f32
    %91 = vector.broadcast %cst_20 : f32 to vector<2x32xf32>
    %92 = arith.divf %90, %91 : vector<2x32xf32>
    %93 = arith.truncf %92 : vector<2x32xf32> to vector<2x32xbf16>
    %cst_21 = arith.constant dense<0.000000e+00> : vector<2x32xf32>
    %94 = tpu.matmul %93, %14, %cst_21 {dimension_numbers = #tpu.dot_dimension_numbers<[1], [0], [0], [1], [0, 0, 1, 1], [], []>} : vector<2x32xbf16>, vector<32x32xbf16>, vector<2x32xf32> -> vector<2x32xf32>
    %95 = vector.broadcast %8 : vector<1x32xf32> to vector<2x32xf32>
    %96 = arith.addf %94, %95 : vector<2x32xf32>
    %cst_22 = arith.constant 0.000000e+00 : f32
    %97 = vector.broadcast %cst_22 : f32 to vector<2x32xf32>
    %98 = arith.maximumf %96, %97 : vector<2x32xf32>
    %99 = arith.addf %98, %92 : vector<2x32xf32>
    %cst_23 = arith.constant dense<0.000000e+00> : vector<32xf32>
    %100 = vector.multi_reduction <add>, %99, %cst_23 [0] : vector<2x32xf32> to vector<32xf32>
    %101 = vector.shape_cast %100 : vector<32xf32> to vector<1x32xf32>
    %cst_24 = arith.constant 2.000000e+00 : f32
    %102 = vector.broadcast %cst_24 : f32 to vector<1x32xf32>
    %103 = arith.divf %101, %102 : vector<1x32xf32>
    %104 = arith.mulf %99, %99 : vector<2x32xf32>
    %cst_25 = arith.constant dense<0.000000e+00> : vector<32xf32>
    %105 = vector.multi_reduction <add>, %104, %cst_25 [0] : vector<2x32xf32> to vector<32xf32>
    %106 = vector.shape_cast %105 : vector<32xf32> to vector<1x32xf32>
    %cst_26 = arith.constant 2.000000e+00 : f32
    %107 = vector.broadcast %cst_26 : f32 to vector<1x32xf32>
    %108 = arith.divf %106, %107 : vector<1x32xf32>
    %109 = arith.mulf %103, %103 : vector<1x32xf32>
    %110 = arith.subf %108, %109 : vector<1x32xf32>
    %111 = vector.broadcast %103 : vector<1x32xf32> to vector<2x32xf32>
    %112 = arith.subf %99, %111 : vector<2x32xf32>
    %cst_27 = arith.constant 9.99999974E-6 : f32
    %113 = vector.broadcast %cst_27 : f32 to vector<1x32xf32>
    %114 = arith.addf %110, %113 : vector<1x32xf32>
    %115 = math.rsqrt %114 : vector<1x32xf32>
    %116 = vector.broadcast %115 : vector<1x32xf32> to vector<2x32xf32>
    %117 = arith.mulf %112, %116 : vector<2x32xf32>
    %118 = vector.broadcast %9 : vector<1x32xf32> to vector<2x32xf32>
    %119 = arith.mulf %117, %118 : vector<2x32xf32>
    %cst_28 = arith.constant dense<0.000000e+00> : vector<2xf32>
    %120 = vector.multi_reduction <add>, %119, %cst_28 [1] : vector<2x32xf32> to vector<2xf32>
    %121 = vector.shape_cast %120 : vector<2xf32> to vector<2x1xf32>
    %122 = vector.broadcast %10 : vector<1x1xf32> to vector<2x1xf32>
    %123 = arith.addf %121, %122 : vector<2x1xf32>
    %c0_29 = arith.constant 0 : index
    %c0_30 = arith.constant 0 : index
    %124 = vector.load %arg4[%c0_29, %c0_30] : memref<2x1xf32, #tpu.memory_space<vmem>>, vector<2x1xf32>
    tpu.vector_store %arg4[%c0_29, %c0_30], %123 {strides = array<i32>} : memref<2x1xf32, #tpu.memory_space<vmem>>, vector<2x1xf32>,
    return
  }
}

</mosaic_0001>

<llo_original>
// kernel: transformer_forward.1
$region0: #{transformer_forward.1}
  #allocation0 [shape = 'u32[]', space=smem, size = 0x4, offset = 0x4, fixed_abs, tag = 'smem constant byte address 0x4 - core index']
  #allocation1 [shape = 'u32[72,128]{1,0:T(1,128)}', space=vmem, size = 0x9000, scoped, tag = 'internal scratch']
  %s0 = inlined_call_operand.vmem [shape: f32[32,1], index: 0, kind: input, shape index: {}]
  %s1 = inlined_call_operand.vmem [shape: bf16[32,160], index: 1, kind: input, shape index: {}]
  %s2 = inlined_call_operand.vmem [shape: f32[10,32], index: 2, kind: input, shape index: {}]
  %s3 = inlined_call_operand.vmem [shape: bf16[128,32], index: 3, kind: input, shape index: {}]
  %s4 = inlined_call_operand.vmem [shape: f32[2,1], index: 4, kind: output, shape index: {}]
  %s5 = sld [smem:[#allocation0]]
  $region26: #{transformer_forward.1} parent=0
    _
  %s7 = ssub.s32 1, %s5
  %s8 = scalar_select 0, %s7, %s5
  // Predicated region
  $region2: #{transformer_forward.1} parent=0 // pred_check
    _
  $region3: #{transformer_forward.1} parent=0 // pred_check_branch
    %10 = sbr.rel (0) target = $region5
  $region4: #{transformer_forward.1} parent=0 // pred_region
    _
  $region5: #{transformer_forward.1} parent=0 // pred_fallthru
    _
  // Predicated region
  $region6: #{transformer_forward.1} parent=0 // pred_check
    _
  $region7: #{transformer_forward.1} parent=0 // pred_check_branch
    %12 = sbr.rel (0) target = $region9
  $region8: #{transformer_forward.1} parent=0 // pred_region
    _
  $region9: #{transformer_forward.1} parent=0 // pred_fallthru
    _
  // Predicated region
  $region10: #{transformer_forward.1} parent=0 // pred_check
    _
  $region11: #{transformer_forward.1} parent=0 // pred_check_branch
    %14 = sbr.rel (0) target = $region13
  $region12: #{transformer_forward.1} parent=0 // pred_region
    _
  $region13: #{transformer_forward.1} parent=0 // pred_fallthru
    _
  // Predicated region
  $region14: #{transformer_forward.1} parent=0 // pred_check
    _
  $region15: #{transformer_forward.1} parent=0 // pred_check_branch
    %16 = sbr.rel (0) target = $region17
  $region16: #{transformer_forward.1} parent=0 // pred_region
    _
  $region17: #{transformer_forward.1} parent=0 // pred_fallthru
    _
  %v18 = vld [vmem:[%s2] sm:$0xff]
  %v19 = vld [vmem:[%s2 + $0x8] sm:$0x3]
  %v20 = vld [vmem:[%s1] sm:$0xff]
  %v21 = vld [vmem:[%s1 + $0x8] sm:$0xff]
  %v22 = vld [vmem:[%s1 + $0x10] sm:$0xff]
  %v23 = vld [vmem:[%s1 + $0x18] sm:$0xff]
  %v24 = vld [vmem:[%s0] sm:$0xff]
  %v25 = vld [vmem:[%s0 + $0x8] sm:$0xff]
  %v26 = vld [vmem:[%s0 + $0x10] sm:$0xff]
  %v27 = vld [vmem:[%s0 + $0x18] sm:$0xff]
  %29 = vset.pattern.permute.xlu0 0
  %30 = vperm.xlu0 %29, %v24
  %v31 = vpop.permute.xlu0 %30
  %34 = vset.pattern.permute.xlu0 0
  %35 = vperm.xlu0 %34, %v25
  %v36 = vpop.permute.xlu0 %35
  %39 = vset.pattern.permute.xlu0 0
  %40 = vperm.xlu0 %39, %v26
  %v41 = vpop.permute.xlu0 %40
  %44 = vset.pattern.permute.xlu0 0
  %45 = vperm.xlu0 %44, %v27
  %v46 = vpop.permute.xlu0 %45
  %v48 = vperm.slane %v18, 0
  %v49 = vmul.f32 %v31, %v48
  %v50 = vmul.f32 %v36, %v48
  %v51 = vmul.f32 %v41, %v48
  %v52 = vmul.f32 %v46, %v48
  %v53 = vperm.slane %v18, 1
  %v54 = vadd.f32 %v49, %v53
  %v55 = vadd.f32 %v50, %v53
  %v56 = vadd.f32 %v51, %v53
  %v57 = vadd.f32 %v52, %v53
  %v58 = vmax.f32 %v54, 0.0
  %v59 = vmax.f32 %v55, 0.0
  %v60 = vmax.f32 %v56, 0.0
  %v61 = vmax.f32 %v57, 0.0
  %v62 = vpack.c.bf16 %v59, %v58
  %v63 = vpack.c.bf16 %v61, %v60
  %v68 = vunpack.c.l.b16 %v20
  %v69 = vunpack.c.l.b16 %v21
  %v70 = vunpack.c.l.b16 %v22
  %v71 = vunpack.c.l.b16 %v23
  %v72 = vpack.c.b16 %v69, %v68
  %v73 = vpack.c.b16 %v71, %v70
  %vm76 = vcmask 261120
  %v78 = vsel %vm76, %v62, 0
  %v81 = vsel %vm76, %v63, 0
  %83 = vmatpush.bf16.msra.mxu0 0
  %84 = vmatpush.bf16.msra.mxu0 0
  %85 = vmatpush.bf16.msra.mxu0 0
  %86 = vmatpush.bf16.msra.mxu0 0
  %87 = vmatpush.bf16.msra.mxu0 0
  %88 = vmatpush.bf16.msra.mxu0 0
  %89 = vmatpush.bf16.msra.mxu0 %v73
  %90 = vmatpush.bf16.msra.mxu0 %v72
  %91 = vmatmul.bf16.gmra.mxu0 %v78
  %v92 = vpop.f32.mrf.mxu0
  %v93 = vadd.f32 0.0, %v92
  %v94 = vpop.f32.mrf.mxu0
  %v95 = vadd.f32 0.0, %v94
  %96 = vmatmul.bf16.gmra.mxu0 %v81
  %v97 = vpop.f32.mrf.mxu0
  %v98 = vadd.f32 0.0, %v97
  %v99 = vpop.f32.mrf.mxu0
  %v100 = vadd.f32 0.0, %v99
  %101 = vdwg.mxu0
  %v102 = vperm.slane %v18, 2
  %v103 = vadd.f32 %v93, %v102
  %v104 = vadd.f32 %v95, %v102
  %v105 = vadd.f32 %v98, %v102
  %v106 = vadd.f32 %v100, %v102
  %v107 = vperm.slane %v18, 3
  %109 = vrot.lane.b32.xlu0 %v107, 32
  %v110 = vpop.permute.xlu0 %109
  %v112 = vadd.f32 %v93, %v110
  %v113 = vadd.f32 %v95, %v110
  %v114 = vadd.f32 %v98, %v110
  %v115 = vadd.f32 %v100, %v110
  %v116 = vperm.slane %v18, 4
  %118 = vrot.lane.b32.xlu0 %v116, 64
  %v119 = vpop.permute.xlu0 %118
  %v121 = vadd.f32 %v93, %v119
  %v122 = vadd.f32 %v95, %v119
  %v123 = vadd.f32 %v98, %v119
  %v124 = vadd.f32 %v100, %v119
  %v125 = vld [vmem:[%s3] sm:$0xf]
  %v126 = vld [vmem:[%s3 + $0x4] sm:$0xf]
  %v127 = vld [vmem:[%s3 + $0x8] sm:$0xf]
  %v128 = vld [vmem:[%s3 + $0xc] sm:$0xf]
  %v129 = vld [vmem:[%s3 + $0x10] sm:$0xf]
  %v130 = vld [vmem:[%s3 + $0x14] sm:$0xf]
  %v131 = vld [vmem:[%s3 + $0x18] sm:$0xf]
  %v132 = vld [vmem:[%s3 + $0x1c] sm:$0xf]
  %v133 = vld [vmem:[%s3 + $0x20] sm:$0xf]
  %v134 = vld [vmem:[%s3 + $0x24] sm:$0xf]
  %v135 = vld [vmem:[%s3 + $0x28] sm:$0xf]
  %v136 = vld [vmem:[%s3 + $0x2c] sm:$0xf]
  %v137 = vld [vmem:[%s3 + $0x30] sm:$0xf]
  %v138 = vld [vmem:[%s3 + $0x34] sm:$0xf]
  %v139 = vld [vmem:[%s3 + $0x38] sm:$0xf]
  %v140 = vld [vmem:[%s3 + $0x3c] sm:$0xf]
  %v141 = vpack.c.bf16 %v112, %v112
  %v142 = vpack.c.bf16 %v113, %v113
  %v143 = vpack.c.bf16 %v114, %v114
  %v144 = vpack.c.bf16 %v115, %v115
  %v149 = vunpack.c.l.b16 %v141
  %v150 = vunpack.c.l.b16 %v142
  %v151 = vunpack.c.l.b16 %v143
  %v152 = vunpack.c.l.b16 %v144
  %v153 = vpack.c.b16 %v150, %v149
  %v154 = vpack.c.b16 %v152, %v151
  %v157 = vunpack.c.l.bf16 %v153
  %v158 = vunpack.c.h.bf16 %v153
  %v159 = vunpack.c.l.bf16 %v154
  %v160 = vunpack.c.h.bf16 %v154
  %v161 = vunpack.c.l.bf16 %v125
  %v162 = vunpack.c.l.bf16 %v126
  %v163 = vunpack.c.l.bf16 %v127
  %v164 = vunpack.c.l.bf16 %v128
  %v165 = vunpack.c.l.bf16 %v129
  %v166 = vunpack.c.l.bf16 %v130
  %v167 = vunpack.c.l.bf16 %v131
  %v168 = vunpack.c.l.bf16 %v132
  %v169 = vunpack.c.l.bf16 %v133
  %v170 = vunpack.c.l.bf16 %v134
  %v171 = vunpack.c.l.bf16 %v135
  %v172 = vunpack.c.l.bf16 %v136
  %v173 = vunpack.c.l.bf16 %v137
  %v174 = vunpack.c.l.bf16 %v138
  %v175 = vunpack.c.l.bf16 %v139
  %v176 = vunpack.c.l.bf16 %v140
  %193 = vrot.lane.b32.xlu0 %v161, 32
  %v194 = vpop.permute.xlu0 %193
  %195 = vrot.lane.b32.xlu0 %v162, 32
  %v196 = vpop.permute.xlu0 %195
  %197 = vrot.lane.b32.xlu0 %v163, 32
  %v198 = vpop.permute.xlu0 %197
  %199 = vrot.lane.b32.xlu0 %v164, 32
  %v200 = vpop.permute.xlu0 %199
  %201 = vrot.lane.b32.xlu0 %v165, 32
  %v202 = vpop.permute.xlu0 %201
  %203 = vrot.lane.b32.xlu0 %v166, 32
  %v204 = vpop.permute.xlu0 %203
  %205 = vrot.lane.b32.xlu0 %v167, 32
  %v206 = vpop.permute.xlu0 %205
  %207 = vrot.lane.b32.xlu0 %v168, 32
  %v208 = vpop.permute.xlu0 %207
  %209 = vrot.lane.b32.xlu0 %v169, 32
  %v210 = vpop.permute.xlu0 %209
  %211 = vrot.lane.b32.xlu0 %v170, 32
  %v212 = vpop.permute.xlu0 %211
  %213 = vrot.lane.b32.xlu0 %v171, 32
  %v214 = vpop.permute.xlu0 %213
  %215 = vrot.lane.b32.xlu0 %v172, 32
  %v216 = vpop.permute.xlu0 %215
  %217 = vrot.lane.b32.xlu0 %v173, 32
  %v218 = vpop.permute.xlu0 %217
  %219 = vrot.lane.b32.xlu0 %v174, 32
  %v220 = vpop.permute.xlu0 %219
  %221 = vrot.lane.b32.xlu0 %v175, 32
  %v222 = vpop.permute.xlu0 %221
  %223 = vrot.lane.b32.xlu0 %v176, 32
  %v224 = vpop.permute.xlu0 %223
  %v241 = vmul.f32 %v157, %v194
  %v242 = vmul.f32 %v158, %v196
  %v243 = vmul.f32 %v157, %v198
  %v244 = vmul.f32 %v158, %v200
  %v245 = vmul.f32 %v157, %v202
  %v246 = vmul.f32 %v158, %v204
  %v247 = vmul.f32 %v157, %v206
  %v248 = vmul.f32 %v158, %v208
  %v249 = vmul.f32 %v157, %v210
  %v250 = vmul.f32 %v158, %v212
  %v251 = vmul.f32 %v157, %v214
  %v252 = vmul.f32 %v158, %v216
  %v253 = vmul.f32 %v157, %v218
  %v254 = vmul.f32 %v158, %v220
  %v255 = vmul.f32 %v157, %v222
  %v256 = vmul.f32 %v158, %v224
  %v257 = vmul.f32 %v159, %v194
  %v258 = vmul.f32 %v160, %v196
  %v259 = vmul.f32 %v159, %v198
  %v260 = vmul.f32 %v160, %v200
  %v261 = vmul.f32 %v159, %v202
  %v262 = vmul.f32 %v160, %v204
  %v263 = vmul.f32 %v159, %v206
  %v264 = vmul.f32 %v160, %v208
  %v265 = vmul.f32 %v159, %v210
  %v266 = vmul.f32 %v160, %v212
  %v267 = vmul.f32 %v159, %v214
  %v268 = vmul.f32 %v160, %v216
  %v269 = vmul.f32 %v159, %v218
  %v270 = vmul.f32 %v160, %v220
  %v271 = vmul.f32 %v159, %v222
  %v272 = vmul.f32 %v160, %v224
  %v273 = vpack.c.bf16 %v241, %v241
  %v274 = vpack.c.bf16 %v242, %v242
  %v275 = vpack.c.bf16 %v243, %v243
  %v276 = vpack.c.bf16 %v244, %v244
  %v277 = vpack.c.bf16 %v245, %v245
  %v278 = vpack.c.bf16 %v246, %v246
  %v279 = vpack.c.bf16 %v247, %v247
  %v280 = vpack.c.bf16 %v248, %v248
  %v281 = vpack.c.bf16 %v249, %v249
  %v282 = vpack.c.bf16 %v250, %v250
  %v283 = vpack.c.bf16 %v251, %v251
  %v284 = vpack.c.bf16 %v252, %v252
  %v285 = vpack.c.bf16 %v253, %v253
  %v286 = vpack.c.bf16 %v254, %v254
  %v287 = vpack.c.bf16 %v255, %v255
  %v288 = vpack.c.bf16 %v256, %v256
  %v289 = vpack.c.bf16 %v257, %v257
  %v290 = vpack.c.bf16 %v258, %v258
  %v291 = vpack.c.bf16 %v259, %v259
  %v292 = vpack.c.bf16 %v260, %v260
  %v293 = vpack.c.bf16 %v261, %v261
  %v294 = vpack.c.bf16 %v262, %v262
  %v295 = vpack.c.bf16 %v263, %v263
  %v296 = vpack.c.bf16 %v264, %v264
  %v297 = vpack.c.bf16 %v265, %v265
  %v298 = vpack.c.bf16 %v266, %v266
  %v299 = vpack.c.bf16 %v267, %v267
  %v300 = vpack.c.bf16 %v268, %v268
  %v301 = vpack.c.bf16 %v269, %v269
  %v302 = vpack.c.bf16 %v270, %v270
  %v303 = vpack.c.bf16 %v271, %v271
  %v304 = vpack.c.bf16 %v272, %v272
  %v305 = vpack.c.bf16 %v121, %v121
  %v306 = vpack.c.bf16 %v122, %v122
  %v307 = vpack.c.bf16 %v123, %v123
  %v308 = vpack.c.bf16 %v124, %v124
  %v313 = vunpack.c.l.b16 %v305
  %v314 = vunpack.c.l.b16 %v306
  %v315 = vunpack.c.l.b16 %v307
  %v316 = vunpack.c.l.b16 %v308
  %v317 = vpack.c.b16 %v314, %v313
  %v318 = vpack.c.b16 %v316, %v315
  %v321 = vunpack.c.l.bf16 %v317
  %v322 = vunpack.c.h.bf16 %v317
  %v323 = vunpack.c.l.bf16 %v318
  %v324 = vunpack.c.h.bf16 %v318
  %325 = vrot.lane.b32.xlu0 %v161, 64
  %v326 = vpop.permute.xlu0 %325
  %327 = vrot.lane.b32.xlu0 %v162, 64
  %v328 = vpop.permute.xlu0 %327
  %329 = vrot.lane.b32.xlu0 %v163, 64
  %v330 = vpop.permute.xlu0 %329
  %331 = vrot.lane.b32.xlu0 %v164, 64
  %v332 = vpop.permute.xlu0 %331
  %333 = vrot.lane.b32.xlu0 %v165, 64
  %v334 = vpop.permute.xlu0 %333
  %335 = vrot.lane.b32.xlu0 %v166, 64
  %v336 = vpop.permute.xlu0 %335
  %337 = vrot.lane.b32.xlu0 %v167, 64
  %v338 = vpop.permute.xlu0 %337
  %339 = vrot.lane.b32.xlu0 %v168, 64
  %v340 = vpop.permute.xlu0 %339
  %341 = vrot.lane.b32.xlu0 %v169, 64
  %v342 = vpop.permute.xlu0 %341
  %343 = vrot.lane.b32.xlu0 %v170, 64
  %v344 = vpop.permute.xlu0 %343
  %345 = vrot.lane.b32.xlu0 %v171, 64
  %v346 = vpop.permute.xlu0 %345
  %347 = vrot.lane.b32.xlu0 %v172, 64
  %v348 = vpop.permute.xlu0 %347
  %349 = vrot.lane.b32.xlu0 %v173, 64
  %v350 = vpop.permute.xlu0 %349
  %351 = vrot.lane.b32.xlu0 %v174, 64
  %v352 = vpop.permute.xlu0 %351
  %353 = vrot.lane.b32.xlu0 %v175, 64
  %v354 = vpop.permute.xlu0 %353
  %355 = vrot.lane.b32.xlu0 %v176, 64
  %v356 = vpop.permute.xlu0 %355
  %v373 = vmul.f32 %v321, %v326
  %v374 = vmul.f32 %v322, %v328
  %v375 = vmul.f32 %v321, %v330
  %v376 = vmul.f32 %v322, %v332
  %v377 = vmul.f32 %v321, %v334
  %v378 = vmul.f32 %v322, %v336
  %v379 = vmul.f32 %v321, %v338
  %v380 = vmul.f32 %v322, %v340
  %v381 = vmul.f32 %v321, %v342
  %v382 = vmul.f32 %v322, %v344
  %v383 = vmul.f32 %v321, %v346
  %v384 = vmul.f32 %v322, %v348
  %v385 = vmul.f32 %v321, %v350
  %v386 = vmul.f32 %v322, %v352
  %v387 = vmul.f32 %v321, %v354
  %v388 = vmul.f32 %v322, %v356
  %v389 = vmul.f32 %v323, %v326
  %v390 = vmul.f32 %v324, %v328
  %v391 = vmul.f32 %v323, %v330
  %v392 = vmul.f32 %v324, %v332
  %v393 = vmul.f32 %v323, %v334
  %v394 = vmul.f32 %v324, %v336
  %v395 = vmul.f32 %v323, %v338
  %v396 = vmul.f32 %v324, %v340
  %v397 = vmul.f32 %v323, %v342
  %v398 = vmul.f32 %v324, %v344
  %v399 = vmul.f32 %v323, %v346
  %v400 = vmul.f32 %v324, %v348
  %v401 = vmul.f32 %v323, %v350
  %v402 = vmul.f32 %v324, %v352
  %v403 = vmul.f32 %v323, %v354
  %v404 = vmul.f32 %v324, %v356
  %v405 = vpack.c.bf16 %v373, %v373
  %v406 = vpack.c.bf16 %v374, %v374
  %v407 = vpack.c.bf16 %v375, %v375
  %v408 = vpack.c.bf16 %v376, %v376
  %v409 = vpack.c.bf16 %v377, %v377
  %v410 = vpack.c.bf16 %v378, %v378
  %v411 = vpack.c.bf16 %v379, %v379
  %v412 = vpack.c.bf16 %v380, %v380
  %v413 = vpack.c.bf16 %v381, %v381
  %v414 = vpack.c.bf16 %v382, %v382
  %v415 = vpack.c.bf16 %v383, %v383
  %v416 = vpack.c.bf16 %v384, %v384
  %v417 = vpack.c.bf16 %v385, %v385
  %v418 = vpack.c.bf16 %v386, %v386
  %v419 = vpack.c.bf16 %v387, %v387
  %v420 = vpack.c.bf16 %v388, %v388
  %v421 = vpack.c.bf16 %v389, %v389
  %v422 = vpack.c.bf16 %v390, %v390
  %v423 = vpack.c.bf16 %v391, %v391
  %v424 = vpack.c.bf16 %v392, %v392
  %v425 = vpack.c.bf16 %v393, %v393
  %v426 = vpack.c.bf16 %v394, %v394
  %v427 = vpack.c.bf16 %v395, %v395
  %v428 = vpack.c.bf16 %v396, %v396
  %v429 = vpack.c.bf16 %v397, %v397
  %v430 = vpack.c.bf16 %v398, %v398
  %v431 = vpack.c.bf16 %v399, %v399
  %v432 = vpack.c.bf16 %v400, %v400
  %v433 = vpack.c.bf16 %v401, %v401
  %v434 = vpack.c.bf16 %v402, %v402
  %v435 = vpack.c.bf16 %v403, %v403
  %v436 = vpack.c.bf16 %v404, %v404
  %v437 = vpack.c.bf16 %v103, %v103
  %v438 = vpack.c.bf16 %v104, %v104
  %v439 = vpack.c.bf16 %v105, %v105
  %v440 = vpack.c.bf16 %v106, %v106
  %v443 = vunpack.c.l.b16 %v437
  %v444 = vunpack.c.l.b16 %v438
  %v445 = vpack.c.b16 %v444, %v443
  %v462 = vunpack.c.l.b16 %v273
  %v463 = vunpack.c.l.b16 %v274
  %v464 = vunpack.c.l.b16 %v275
  %v465 = vunpack.c.l.b16 %v276
  %v466 = vunpack.c.l.b16 %v277
  %v467 = vunpack.c.l.b16 %v278
  %v468 = vunpack.c.l.b16 %v279
  %v469 = vunpack.c.l.b16 %v280
  %v470 = vunpack.c.l.b16 %v281
  %v471 = vunpack.c.l.b16 %v282
  %v472 = vunpack.c.l.b16 %v283
  %v473 = vunpack.c.l.b16 %v284
  %v474 = vunpack.c.l.b16 %v285
  %v475 = vunpack.c.l.b16 %v286
  %v476 = vunpack.c.l.b16 %v287
  %v477 = vunpack.c.l.b16 %v288
  %v478 = vpack.c.b16 %v463, %v462
  %v479 = vpack.c.b16 %v465, %v464
  %v480 = vpack.c.b16 %v467, %v466
  %v481 = vpack.c.b16 %v469, %v468
  %v482 = vpack.c.b16 %v471, %v470
  %v483 = vpack.c.b16 %v473, %v472
  %v484 = vpack.c.b16 %v475, %v474
  %v485 = vpack.c.b16 %v477, %v476
  %486 = vrot.lane.b32.xlu0 %v478, 96
  %v487 = vpop.permute.xlu0 %486
  %488 = vrot.lane.b32.xlu0 %v479, 96
  %v489 = vpop.permute.xlu0 %488
  %490 = vrot.lane.b32.xlu0 %v480, 96
  %v491 = vpop.permute.xlu0 %490
  %492 = vrot.lane.b32.xlu0 %v481, 96
  %v493 = vpop.permute.xlu0 %492
  %494 = vrot.lane.b32.xlu0 %v482, 96
  %v495 = vpop.permute.xlu0 %494
  %496 = vrot.lane.b32.xlu0 %v483, 96
  %v497 = vpop.permute.xlu0 %496
  %498 = vrot.lane.b32.xlu0 %v484, 96
  %v499 = vpop.permute.xlu0 %498
  %500 = vrot.lane.b32.xlu0 %v485, 96
  %v501 = vpop.permute.xlu0 %500
  %v503 = vsel %vm76, %v445, 0
  %v506 = vsel %vm76, %v487, 0
  %v509 = vsel %vm76, %v489, 0
  %v512 = vsel %vm76, %v491, 0
  %v515 = vsel %vm76, %v493, 0
  %v518 = vsel %vm76, %v495, 0
  %v521 = vsel %vm76, %v497, 0
  %v524 = vsel %vm76, %v499, 0
  %v527 = vsel %vm76, %v501, 0
  %529 = vmatpush.bf16.xpose.msra.mxu0 %v527
  %530 = vmatpush.bf16.xpose.msra.mxu0 %v524
  %531 = vmatpush.bf16.xpose.msra.mxu0 %v521
  %532 = vmatpush.bf16.xpose.msra.mxu0 %v518
  %533 = vmatpush.bf16.xpose.msra.mxu0 %v515
  %534 = vmatpush.bf16.xpose.msra.mxu0 %v512
  %535 = vmatpush.bf16.xpose.msra.mxu0 %v509
  %536 = vmatpush.bf16.xpose.msra.mxu0 %v506
  %537 = vmatmul.bf16.gmra.mxu0 %v503
  %v538 = vpop.f32.mrf.mxu0
  %v539 = vadd.f32 0.0, %v538
  %v540 = vpop.f32.mrf.mxu0
  %v541 = vadd.f32 0.0, %v540
  %542 = vdwg.mxu0
  %v545 = vunpack.c.l.b16 %v439
  %v546 = vunpack.c.l.b16 %v440
  %v547 = vpack.c.b16 %v546, %v545
  %v564 = vunpack.c.l.b16 %v289
  %v565 = vunpack.c.l.b16 %v290
  %v566 = vunpack.c.l.b16 %v291
  %v567 = vunpack.c.l.b16 %v292
  %v568 = vunpack.c.l.b16 %v293
  %v569 = vunpack.c.l.b16 %v294
  %v570 = vunpack.c.l.b16 %v295
  %v571 = vunpack.c.l.b16 %v296
  %v572 = vunpack.c.l.b16 %v297
  %v573 = vunpack.c.l.b16 %v298
  %v574 = vunpack.c.l.b16 %v299
  %v575 = vunpack.c.l.b16 %v300
  %v576 = vunpack.c.l.b16 %v301
  %v577 = vunpack.c.l.b16 %v302
  %v578 = vunpack.c.l.b16 %v303
  %v579 = vunpack.c.l.b16 %v304
  %v580 = vpack.c.b16 %v565, %v564
  %v581 = vpack.c.b16 %v567, %v566
  %v582 = vpack.c.b16 %v569, %v568
  %v583 = vpack.c.b16 %v571, %v570
  %v584 = vpack.c.b16 %v573, %v572
  %v585 = vpack.c.b16 %v575, %v574
  %v586 = vpack.c.b16 %v577, %v576
  %v587 = vpack.c.b16 %v579, %v578
  %588 = vrot.lane.b32.xlu0 %v580, 96
  %v589 = vpop.permute.xlu0 %588
  %590 = vrot.lane.b32.xlu0 %v581, 96
  %v591 = vpop.permute.xlu0 %590
  %592 = vrot.lane.b32.xlu0 %v582, 96
  %v593 = vpop.permute.xlu0 %592
  %594 = vrot.lane.b32.xlu0 %v583, 96
  %v595 = vpop.permute.xlu0 %594
  %596 = vrot.lane.b32.xlu0 %v584, 96
  %v597 = vpop.permute.xlu0 %596
  %598 = vrot.lane.b32.xlu0 %v585, 96
  %v599 = vpop.permute.xlu0 %598
  %600 = vrot.lane.b32.xlu0 %v586, 96
  %v601 = vpop.permute.xlu0 %600
  %602 = vrot.lane.b32.xlu0 %v587, 96
  %v603 = vpop.permute.xlu0 %602
  %v605 = vsel %vm76, %v547, 0
  %v608 = vsel %vm76, %v589, 0
  %v611 = vsel %vm76, %v591, 0
  %v614 = vsel %vm76, %v593, 0
  %v617 = vsel %vm76, %v595, 0
  %v620 = vsel %vm76, %v597, 0
  %v623 = vsel %vm76, %v599, 0
  %v626 = vsel %vm76, %v601, 0
  %v629 = vsel %vm76, %v603, 0
  %631 = vmatpush.bf16.xpose.msra.mxu0 %v629
  %632 = vmatpush.bf16.xpose.msra.mxu0 %v626
  %633 = vmatpush.bf16.xpose.msra.mxu0 %v623
  %634 = vmatpush.bf16.xpose.msra.mxu0 %v620
  %635 = vmatpush.bf16.xpose.msra.mxu0 %v617
  %636 = vmatpush.bf16.xpose.msra.mxu0 %v614
  %637 = vmatpush.bf16.xpose.msra.mxu0 %v611
  %638 = vmatpush.bf16.xpose.msra.mxu0 %v608
  %639 = vmatmul.bf16.gmra.mxu0 %v605
  %v640 = vpop.f32.mrf.mxu0
  %v641 = vadd.f32 0.0, %v640
  %v642 = vpop.f32.mrf.mxu0
  %v643 = vadd.f32 0.0, %v642
  %644 = vdwg.mxu0
  %645 = vmax.xlane.f32.xlu0 %v539
  %v646 = vpop.xlane.xlu0 %645
  %647 = vmax.xlane.f32.xlu0 %v541
  %v648 = vpop.xlane.xlu0 %647
  %649 = vmax.xlane.f32.xlu0 %v641
  %v650 = vpop.xlane.xlu0 %649
  %651 = vmax.xlane.f32.xlu0 %v643
  %v652 = vpop.xlane.xlu0 %651
  %v653 = vsub.f32 %v539, %v646
  %v654 = vsub.f32 %v541, %v648
  %v655 = vsub.f32 %v641, %v650
  %v656 = vsub.f32 %v643, %v652
  %v657 = vmul.f32 %v653, 1.442695
  %v658 = vpow.pop %v657
  %v659 = vmul.f32 %v654, 1.442695
  %v660 = vpow.pop %v659
  %v661 = vmul.f32 %v655, 1.442695
  %v662 = vpow.pop %v661
  %v663 = vmul.f32 %v656, 1.442695
  %v664 = vpow.pop %v663
  %v665 = vpack.c.bf16 %v658, %v658
  %v666 = vpack.c.bf16 %v660, %v660
  %v667 = vpack.c.bf16 %v662, %v662
  %v668 = vpack.c.bf16 %v664, %v664
  %v671 = vunpack.c.l.b16 %v665
  %v672 = vunpack.c.l.b16 %v666
  %v673 = vpack.c.b16 %v672, %v671
  %v691 = vunpack.c.l.b16 %v405
  %v692 = vunpack.c.l.b16 %v406
  %v693 = vunpack.c.l.b16 %v407
  %v694 = vunpack.c.l.b16 %v408
  %v695 = vunpack.c.l.b16 %v409
  %v696 = vunpack.c.l.b16 %v410
  %v697 = vunpack.c.l.b16 %v411
  %v698 = vunpack.c.l.b16 %v412
  %v699 = vunpack.c.l.b16 %v413
  %v700 = vunpack.c.l.b16 %v414
  %v701 = vunpack.c.l.b16 %v415
  %v702 = vunpack.c.l.b16 %v416
  %v703 = vunpack.c.l.b16 %v417
  %v704 = vunpack.c.l.b16 %v418
  %v705 = vunpack.c.l.b16 %v419
  %v706 = vunpack.c.l.b16 %v420
  %v707 = vpack.c.b16 %v692, %v691
  %v708 = vpack.c.b16 %v694, %v693
  %v709 = vpack.c.b16 %v696, %v695
  %v710 = vpack.c.b16 %v698, %v697
  %v711 = vpack.c.b16 %v700, %v699
  %v712 = vpack.c.b16 %v702, %v701
  %v713 = vpack.c.b16 %v704, %v703
  %v714 = vpack.c.b16 %v706, %v705
  %715 = vrot.lane.b32.xlu0 %v707, 64
  %v716 = vpop.permute.xlu0 %715
  %717 = vrot.lane.b32.xlu0 %v708, 64
  %v718 = vpop.permute.xlu0 %717
  %719 = vrot.lane.b32.xlu0 %v709, 64
  %v720 = vpop.permute.xlu0 %719
  %721 = vrot.lane.b32.xlu0 %v710, 64
  %v722 = vpop.permute.xlu0 %721
  %723 = vrot.lane.b32.xlu0 %v711, 64
  %v724 = vpop.permute.xlu0 %723
  %725 = vrot.lane.b32.xlu0 %v712, 64
  %v726 = vpop.permute.xlu0 %725
  %727 = vrot.lane.b32.xlu0 %v713, 64
  %v728 = vpop.permute.xlu0 %727
  %729 = vrot.lane.b32.xlu0 %v714, 64
  %v730 = vpop.permute.xlu0 %729
  %739 = vmatpush.bf16.msra.mxu0 %v730
  %740 = vmatpush.bf16.msra.mxu0 %v728
  %741 = vmatpush.bf16.msra.mxu0 %v726
  %742 = vmatpush.bf16.msra.mxu0 %v724
  %743 = vmatpush.bf16.msra.mxu0 %v722
  %744 = vmatpush.bf16.msra.mxu0 %v720
  %745 = vmatpush.bf16.msra.mxu0 %v718
  %746 = vmatpush.bf16.msra.mxu0 %v716
  %747 = vmatmul.bf16.gmra.mxu0 %v673
  %v748 = vpop.f32.mrf.mxu0
  %v749 = vadd.f32 0.0, %v748
  %v750 = vpop.f32.mrf.mxu0
  %v751 = vadd.f32 0.0, %v750
  %752 = vdwg.mxu0
  %v755 = vunpack.c.l.b16 %v667
  %v756 = vunpack.c.l.b16 %v668
  %v757 = vpack.c.b16 %v756, %v755
  %v775 = vunpack.c.l.b16 %v421
  %v776 = vunpack.c.l.b16 %v422
  %v777 = vunpack.c.l.b16 %v423
  %v778 = vunpack.c.l.b16 %v424
  %v779 = vunpack.c.l.b16 %v425
  %v780 = vunpack.c.l.b16 %v426
  %v781 = vunpack.c.l.b16 %v427
  %v782 = vunpack.c.l.b16 %v428
  %v783 = vunpack.c.l.b16 %v429
  %v784 = vunpack.c.l.b16 %v430
  %v785 = vunpack.c.l.b16 %v431
  %v786 = vunpack.c.l.b16 %v432
  %v787 = vunpack.c.l.b16 %v433
  %v788 = vunpack.c.l.b16 %v434
  %v789 = vunpack.c.l.b16 %v435
  %v790 = vunpack.c.l.b16 %v436
  %v791 = vpack.c.b16 %v776, %v775
  %v792 = vpack.c.b16 %v778, %v777
  %v793 = vpack.c.b16 %v780, %v779
  %v794 = vpack.c.b16 %v782, %v781
  %v795 = vpack.c.b16 %v784, %v783
  %v796 = vpack.c.b16 %v786, %v785
  %v797 = vpack.c.b16 %v788, %v787
  %v798 = vpack.c.b16 %v790, %v789
  %799 = vrot.lane.b32.xlu0 %v791, 64
  %v800 = vpop.permute.xlu0 %799
  %801 = vrot.lane.b32.xlu0 %v792, 64
  %v802 = vpop.permute.xlu0 %801
  %803 = vrot.lane.b32.xlu0 %v793, 64
  %v804 = vpop.permute.xlu0 %803
  %805 = vrot.lane.b32.xlu0 %v794, 64
  %v806 = vpop.permute.xlu0 %805
  %807 = vrot.lane.b32.xlu0 %v795, 64
  %v808 = vpop.permute.xlu0 %807
  %809 = vrot.lane.b32.xlu0 %v796, 64
  %v810 = vpop.permute.xlu0 %809
  %811 = vrot.lane.b32.xlu0 %v797, 64
  %v812 = vpop.permute.xlu0 %811
  %813 = vrot.lane.b32.xlu0 %v798, 64
  %v814 = vpop.permute.xlu0 %813
  %823 = vmatpush.bf16.msra.mxu0 %v814
  %824 = vmatpush.bf16.msra.mxu0 %v812
  %825 = vmatpush.bf16.msra.mxu0 %v810
  %826 = vmatpush.bf16.msra.mxu0 %v808
  %827 = vmatpush.bf16.msra.mxu0 %v806
  %828 = vmatpush.bf16.msra.mxu0 %v804
  %829 = vmatpush.bf16.msra.mxu0 %v802
  %830 = vmatpush.bf16.msra.mxu0 %v800
  %831 = vmatmul.bf16.gmra.mxu0 %v757
  %v832 = vpop.f32.mrf.mxu0
  %v833 = vadd.f32 0.0, %v832
  %v834 = vpop.f32.mrf.mxu0
  %v835 = vadd.f32 0.0, %v834
  %836 = vdwg.mxu0
  %v853 = vunpack.c.l.b16 %v125
  %v854 = vunpack.c.l.b16 %v126
  %v855 = vunpack.c.l.b16 %v127
  %v856 = vunpack.c.l.b16 %v128
  %v857 = vunpack.c.l.b16 %v129
  %v858 = vunpack.c.l.b16 %v130
  %v859 = vunpack.c.l.b16 %v131
  %v860 = vunpack.c.l.b16 %v132
  %v861 = vunpack.c.l.b16 %v133
  %v862 = vunpack.c.l.b16 %v134
  %v863 = vunpack.c.l.b16 %v135
  %v864 = vunpack.c.l.b16 %v136
  %v865 = vunpack.c.l.b16 %v137
  %v866 = vunpack.c.l.b16 %v138
  %v867 = vunpack.c.l.b16 %v139
  %v868 = vunpack.c.l.b16 %v140
  %v869 = vpack.c.b16 %v854, %v853
  %v870 = vpack.c.b16 %v856, %v855
  %v871 = vpack.c.b16 %v858, %v857
  %v872 = vpack.c.b16 %v860, %v859
  %v873 = vpack.c.b16 %v862, %v861
  %v874 = vpack.c.b16 %v864, %v863
  %v875 = vpack.c.b16 %v866, %v865
  %v876 = vpack.c.b16 %v868, %v867
  %885 = vmatpush.bf16.msra.mxu0 %v876
  %886 = vmatpush.bf16.msra.mxu0 %v875
  %887 = vmatpush.bf16.msra.mxu0 %v874
  %888 = vmatpush.bf16.msra.mxu0 %v873
  %889 = vmatpush.bf16.msra.mxu0 %v872
  %890 = vmatpush.bf16.msra.mxu0 %v871
  %891 = vmatpush.bf16.msra.mxu0 %v870
  %892 = vmatpush.bf16.msra.mxu0 %v869
  %893 = vmatmul.bf16.gmra.mxu0 %v673
  %v894 = vpop.f32.mrf.mxu0
  %v895 = vadd.f32 0.0, %v894
  %v896 = vpop.f32.mrf.mxu0
  %v897 = vadd.f32 0.0, %v896
  %898 = vmatmul.bf16.gmra.mxu0 %v757
  %v899 = vpop.f32.mrf.mxu0
  %v900 = vadd.f32 0.0, %v899
  %v901 = vpop.f32.mrf.mxu0
  %v902 = vadd.f32 0.0, %v901
  %903 = vdwg.mxu0
  %v904 = vmax.f32 %v895, 1e-30
  %v905 = vmax.f32 %v897, 1e-30
  %v906 = vmax.f32 %v900, 1e-30
  %v907 = vmax.f32 %v902, 1e-30
  %v908 = vrcp.pop %v904
  %v909 = vrcp.pop %v905
  %v910 = vrcp.pop %v906
  %v911 = vrcp.pop %v907
  %v912 = vmul.f32 %v749, %v908
  %v913 = vmul.f32 %v751, %v909
  %v914 = vmul.f32 %v833, %v910
  %v915 = vmul.f32 %v835, %v911
  %v916 = vpack.c.bf16 %v913, %v912
  %v917 = vpack.c.bf16 %v915, %v914
  %918 = vrot.lane.b32.xlu0 %v72, 32
  %v919 = vpop.permute.xlu0 %918
  %920 = vrot.lane.b32.xlu0 %v73, 32
  %v921 = vpop.permute.xlu0 %920
  %v925 = vsel %vm76, %v916, 0
  %v928 = vsel %vm76, %v917, 0
  %930 = vmatpush.bf16.msra.mxu0 0
  %931 = vmatpush.bf16.msra.mxu0 0
  %932 = vmatpush.bf16.msra.mxu0 0
  %933 = vmatpush.bf16.msra.mxu0 0
  %934 = vmatpush.bf16.msra.mxu0 0
  %935 = vmatpush.bf16.msra.mxu0 0
  %936 = vmatpush.bf16.msra.mxu0 %v921
  %937 = vmatpush.bf16.msra.mxu0 %v919
  %938 = vmatmul.bf16.gmra.mxu0 %v925
  %v939 = vpop.f32.mrf.mxu0
  %v940 = vadd.f32 %v58, %v939
  %v941 = vpop.f32.mrf.mxu0
  %v942 = vadd.f32 %v59, %v941
  %943 = vmatmul.bf16.gmra.mxu0 %v928
  %v944 = vpop.f32.mrf.mxu0
  %v945 = vadd.f32 %v60, %v944
  %v946 = vpop.f32.mrf.mxu0
  %v947 = vadd.f32 %v61, %v946
  %948 = vdwg.mxu0
  %v949 = vsel %vm76, %v940, 0.0
  %v950 = vsel %vm76, %v942, 0.0
  %v951 = vadd.f32 %v949, %v950
  %v952 = vsel %vm76, %v945, 0.0
  %v953 = vadd.f32 %v951, %v952
  %v954 = vsel %vm76, %v947, 0.0
  %v955 = vadd.f32 %v953, %v954
  %v956 = vrot.slane %v955, 4
  %v957 = vadd.f32 %v955, %v956
  %v958 = vrot.slane %v957, 2
  %v959 = vadd.f32 %v957, %v958
  %v960 = vrot.slane %v959, 1
  %v961 = vadd.f32 %v959, %v960
  %v962 = vrcp.pop 32.0
  %v963 = vmul.f32 32.0, %v962
  %v964 = vsub.f32 1.0, %v963
  %v965 = vmul.f32 %v962, %v964
  %v966 = vadd.f32 %v962, %v965
  %vm967 = vweird.f32 %v962
  %v968 = vsel %vm967, %v962, %v966
  %v969 = vmul.f32 %v961, %v968
  %v970 = vmul.f32 %v940, %v940
  %v971 = vmul.f32 %v942, %v942
  %v972 = vmul.f32 %v945, %v945
  %v973 = vmul.f32 %v947, %v947
  %v974 = vsel %vm76, %v970, 0.0
  %v975 = vsel %vm76, %v971, 0.0
  %v976 = vadd.f32 %v974, %v975
  %v977 = vsel %vm76, %v972, 0.0
  %v978 = vadd.f32 %v976, %v977
  %v979 = vsel %vm76, %v973, 0.0
  %v980 = vadd.f32 %v978, %v979
  %v981 = vrot.slane %v980, 4
  %v982 = vadd.f32 %v980, %v981
  %v983 = vrot.slane %v982, 2
  %v984 = vadd.f32 %v982, %v983
  %v985 = vrot.slane %v984, 1
  %v986 = vadd.f32 %v984, %v985
  %v987 = vmul.f32 %v986, %v968
  %v988 = vmul.f32 %v969, %v969
  %v989 = vsub.f32 %v987, %v988
  %v990 = vsub.f32 %v940, %v969
  %v991 = vsub.f32 %v942, %v969
  %v992 = vsub.f32 %v945, %v969
  %v993 = vsub.f32 %v947, %v969
  %v994 = vadd.f32 %v989, 1e-05
  %v995 = vrsqrt.pop %v994
  %v996 = vmul.f32 %v995, %v994
  %v997 = vmul.f32 %v996, %v995
  %v998 = vmul.f32 0.5, %v997
  %v999 = vsub.f32 1.5, %v998
  %v1000 = vmul.f32 %v995, %v999
  %vm1001 = vweird.f32 %v994
  %vm1002 = vweird.f32 %v995
  %vm1003 = vmor %vm1001, %vm1002
  %v1004 = vsel %vm1003, %v995, %v1000
  %v1005 = vmul.f32 %v990, %v1004
  %v1006 = vmul.f32 %v991, %v1004
  %v1007 = vmul.f32 %v992, %v1004
  %v1008 = vmul.f32 %v993, %v1004
  %v1009 = vperm.slane %v18, 5
  %v1010 = vmul.f32 %v1005, %v1009
  %v1011 = vmul.f32 %v1006, %v1009
  %v1012 = vmul.f32 %v1007, %v1009
  %v1013 = vmul.f32 %v1008, %v1009
  %v1014 = vperm.slane %v18, 6
  %v1015 = vadd.f32 %v1010, %v1014
  %v1016 = vadd.f32 %v1011, %v1014
  %v1017 = vadd.f32 %v1012, %v1014
  %v1018 = vadd.f32 %v1013, %v1014
  %v1019 = vsel %vm76, %v1015, 0.0
  %v1020 = vsel %vm76, %v1016, 0.0
  %v1021 = vadd.f32 %v1019, %v1020
  %v1022 = vrot.slane %v1021, 4
  %v1023 = vadd.f32 %v1021, %v1022
  %v1024 = vrot.slane %v1023, 2
  %v1025 = vadd.f32 %v1023, %v1024
  %v1026 = vrot.slane %v1025, 1
  %v1027 = vadd.f32 %v1025, %v1026
  %v1028 = vsel %vm76, %v1017, 0.0
  %v1029 = vsel %vm76, %v1018, 0.0
  %v1030 = vadd.f32 %v1028, %v1029
  %v1031 = vrot.slane %v1030, 4
  %v1032 = vadd.f32 %v1030, %v1031
  %v1033 = vrot.slane %v1032, 2
  %v1034 = vadd.f32 %v1032, %v1033
  %v1035 = vrot.slane %v1034, 1
  %v1036 = vadd.f32 %v1034, %v1035
  %v1037 = vrcp.pop 16.0
  %v1038 = vmul.f32 16.0, %v1037
  %v1039 = vsub.f32 1.0, %v1038
  %v1040 = vmul.f32 %v1037, %v1039
  %v1041 = vadd.f32 %v1037, %v1040
  %vm1042 = vweird.f32 %v1037
  %v1043 = vsel %vm1042, %v1037, %v1041
  %v1044 = vmul.f32 %v1027, %v1043
  %v1045 = vmul.f32 %v1036, %v1043
  %v1046 = vpack.c.bf16 %v1044, %v1044
  %v1047 = vpack.c.bf16 %v1045, %v1045
  %v1048 = vperm.slane %v18, 7
  %v1051 = vunpack.c.l.b16 %v1046
  %v1052 = vunpack.c.l.b16 %v1047
  %vm1053 = vcmask 1041409
  %v1054 = vsel %vm1053, %v1052, %v1051
  %v1055 = vpack.c.b16 %v1054, %v1054
  %v1056 = vunpack.c.h.b16 %v20
  %v1057 = vunpack.c.h.b16 %v21
  %v1058 = vunpack.c.h.b16 %v22
  %v1059 = vunpack.c.h.b16 %v23
  %v1060 = vpack.c.b16 %v1057, %v1056
  %v1061 = vpack.c.b16 %v1059, %v1058
  %v1065 = vsel %vm76, %v1055, 0
  %1067 = vmatpush.bf16.msra.mxu0 0
  %1068 = vmatpush.bf16.msra.mxu0 0
  %1069 = vmatpush.bf16.msra.mxu0 0
  %1070 = vmatpush.bf16.msra.mxu0 0
  %1071 = vmatpush.bf16.msra.mxu0 0
  %1072 = vmatpush.bf16.msra.mxu0 0
  %1073 = vmatpush.bf16.msra.mxu0 %v1061
  %1074 = vmatpush.bf16.msra.mxu0 %v1060
  %1075 = vmatmul.bf16.gmra.mxu0 %v1065
  %v1076 = vpop.f32.mrf.mxu0
  %v1077 = vadd.f32 %v1048, %v1076
  %v1078 = vpop.f32.mrf.mxu0
  %1079 = vdwg.mxu0
  %v1080 = vmax.f32 %v1077, 0.0
  %v1083 = vsel %vm1053, %v1045, %v1044
  %v1085 = vadd.f32 %v1080, %v1083
  %vm1086 = vcmask 254976
  %v1087 = vsel %vm1086, %v1085, 0.0
  %v1088 = vrot.slane %v1087, 4
  %v1089 = vadd.f32 %v1087, %v1088
  %v1090 = vrot.slane %v1089, 2
  %v1091 = vadd.f32 %v1089, %v1090
  %v1092 = vrot.slane %v1091, 1
  %v1093 = vadd.f32 %v1091, %v1092
  %v1094 = vrcp.pop 2.0
  %v1095 = vmul.f32 2.0, %v1094
  %v1096 = vsub.f32 1.0, %v1095
  %v1097 = vmul.f32 %v1094, %v1096
  %v1098 = vadd.f32 %v1094, %v1097
  %vm1099 = vweird.f32 %v1094
  %v1100 = vsel %vm1099, %v1094, %v1098
  %v1101 = vmul.f32 %v1093, %v1100
  %v1102 = vmul.f32 %v1085, %v1085
  %v1103 = vsel %vm1086, %v1102, 0.0
  %v1104 = vrot.slane %v1103, 4
  %v1105 = vadd.f32 %v1103, %v1104
  %v1106 = vrot.slane %v1105, 2
  %v1107 = vadd.f32 %v1105, %v1106
  %v1108 = vrot.slane %v1107, 1
  %v1109 = vadd.f32 %v1107, %v1108
  %v1110 = vmul.f32 %v1109, %v1100
  %v1111 = vmul.f32 %v1101, %v1101
  %v1112 = vsub.f32 %v1110, %v1111
  %v1113 = vsub.f32 %v1085, %v1101
  %v1114 = vadd.f32 %v1112, 1e-05
  %v1115 = vrsqrt.pop %v1114
  %v1116 = vmul.f32 %v1115, %v1114
  %v1117 = vmul.f32 %v1116, %v1115
  %v1118 = vmul.f32 0.5, %v1117
  %v1119 = vsub.f32 1.5, %v1118
  %v1120 = vmul.f32 %v1115, %v1119
  %vm1121 = vweird.f32 %v1114
  %vm1122 = vweird.f32 %v1115
  %vm1123 = vmor %vm1121, %vm1122
  %v1124 = vsel %vm1123, %v1115, %v1120
  %v1125 = vmul.f32 %v1113, %v1124
  %v1126 = vperm.slane %v19, 0
  %v1127 = vmul.f32 %v1125, %v1126
  %v1128 = vsel %vm1086, %v1127, 0.0
  %1129 = vadd.xlane.f32.xlu0 %v1128
  %v1130 = vpop.xlane.xlu0 %1129
  %v1131 = vperm.slane %v19, 1
  %v1132 = vadd.f32 %v1130, %v1131
  %vm1133 = vcmask 1024
  %1134 = vst.msk [vmem:[%s4] sm:$0x3] %vm1133, %v1132
  // Predicated region
  $region18: #{transformer_forward.1} parent=0 // pred_check
    _
  $region19: #{transformer_forward.1} parent=0 // pred_check_branch
    %1136 = sbr.rel (0) target = $region21
  $region20: #{transformer_forward.1} parent=0 // pred_region
    _
  $region21: #{transformer_forward.1} parent=0 // pred_fallthru
    _
  // Predicated region
  $region22: #{transformer_forward.1} parent=0 // pred_check
    _
  $region23: #{transformer_forward.1} parent=0 // pred_check_branch
    %1138 = sbr.rel (0) target = $region25
  $region24: #{transformer_forward.1} parent=0 // pred_region
    _
  $region25: #{transformer_forward.1} parent=0 // pred_fallthru
    _

</llo_original>
